<compile_context>
chip_gen: v6e
topology: v6e:2x2x1
jax: 0.10.0
libtpu: 0.0.40
codegen_flags: <defaults>
</compile_context>

<pallas_src>
import jax
import jax.numpy as jnp
from jax.experimental import pallas as pl
from jax.experimental.pallas import tpu as pltpu

EPS = 1e-5


def layernorm_kernel(x_ref, w_ref, b_ref, o_ref):
    x = x_ref[...]            # (N, C) f32
    w = w_ref[...]            # (1, C) f32
    b = b_ref[...]            # (1, C) f32

    inv_c = 1.0 / x.shape[-1]
    # single-pass statistics: one sweep produces sum(x) and sum(x*x)
    s = jnp.sum(x, axis=-1, keepdims=True)
    s2 = jnp.sum(x * x, axis=-1, keepdims=True)
    mu = s * inv_c
    var = s2 * inv_c - mu * mu
    inv_std = jax.lax.rsqrt(var + EPS)        # EUP rsqrt (free bundle slot)

    o_ref[...] = (x - mu) * inv_std * w + b


def layer_norm(x, weight, bias=None):
    """LayerNorm over the last dim of x, matching F.layer_norm(..., eps=1e-5)."""
    orig_shape = x.shape
    C = orig_shape[-1]
    N = 1
    for d in orig_shape[:-1]:
        N *= d

    x2 = x.reshape(N, C).astype(jnp.float32)
    w2 = weight.reshape(1, C).astype(jnp.float32)
    if bias is None:
        b2 = jnp.zeros((1, C), jnp.float32)   # LayerNorm(bias=False) path
    else:
        b2 = bias.reshape(1, C).astype(jnp.float32)

    out = pl.pallas_call(
        layernorm_kernel,
        out_shape=jax.ShapeDtypeStruct((N, C), jnp.float32),
        grid_spec=pltpu.PrefetchScalarGridSpec(
            num_scalar_prefetch=0,
            grid=(1,),                                   # collapsed grid: one step
            in_specs=[
                pl.BlockSpec((N, C), lambda i: (0, 0)),  # full array in VMEM
                pl.BlockSpec((1, C), lambda i: (0, 0)),
                pl.BlockSpec((1, C), lambda i: (0, 0)),
            ],
            out_specs=pl.BlockSpec((N, C), lambda i: (0, 0)),
        ),
        compiler_params=pltpu.CompilerParams(
            dimension_semantics=("arbitrary",)),
    )(x2, w2, b2)
    return out.reshape(orig_shape)


def layer_norm_ref(x, weight, bias=None):
    mu = jnp.mean(x, axis=-1, keepdims=True)
    var = jnp.mean((x - mu) ** 2, axis=-1, keepdims=True)
    y = (x - mu) * jax.lax.rsqrt(var + EPS) * weight
    if bias is not None:
        y = y + bias
    return y


if __name__ == "__main__":
    # small shapes consistent with tiny_transformer: batch=2, seq=8, n_embd=32
    B, T, C = 2, 8, 32
    key = jax.random.PRNGKey(0)
    kx, kw, kb = jax.random.split(key, 3)

    x = jax.random.normal(kx, (B, T, C), jnp.float32)
    # randomize weight/bias so the affine part is actually exercised
    weight = 1.0 + 0.1 * jax.random.normal(kw, (C,), jnp.float32)
    bias = 0.1 * jax.random.normal(kb, (C,), jnp.float32)

    # with bias (LayerNorm(ndim, bias=True))
    out = layer_norm(x, weight, bias)
    out = jax.block_until_ready(out)
    ref = layer_norm_ref(x, weight, bias)
    assert out.shape == (B, T, C)
    assert jnp.allclose(out, ref, rtol=1e-4, atol=1e-4), "mismatch vs reference (bias=True)"

    # without bias (LayerNorm(ndim, bias=False))
    out_nb = jax.block_until_ready(layer_norm(x, weight, None))
    ref_nb = layer_norm_ref(x, weight, None)
    assert jnp.allclose(out_nb, ref_nb, rtol=1e-4, atol=1e-4), "mismatch vs reference (bias=False)"

    print("KERNEL_OK")
</pallas_src>

<mosaic_0001>
module attributes {stable_mosaic.version = 11 : i64} {
  func.func @layernorm_kernel(%arg0: i32, %arg1: memref<16x32xf32, #tpu.memory_space<vmem>>, %arg2: memref<1x32xf32, #tpu.memory_space<vmem>>, %arg3: memref<1x32xf32, #tpu.memory_space<vmem>>, %arg4: memref<16x32xf32, #tpu.memory_space<vmem>>) attributes {dimension_semantics = [#tpu.dimension_semantics<arbitrary>], iteration_bounds = array<i64: 1>, scalar_prefetch = 0 : i64, scratch_operands = 0 : i64, tpu.core_type = #tpu.core_type<tc>, window_params = [{pipeline_mode = #tpu.pipeline_mode<synchronous>, transform_indices = @transform_0, window_bounds = array<i64: 16, 32>}, {pipeline_mode = #tpu.pipeline_mode<synchronous>, transform_indices = @transform_1, window_bounds = array<i64: 1, 32>}, {pipeline_mode = #tpu.pipeline_mode<synchronous>, transform_indices = @transform_2, window_bounds = array<i64: 1, 32>}, {pipeline_mode = #tpu.pipeline_mode<synchronous>, transform_indices = @transform_3, window_bounds = array<i64: 16, 32>}]} {
    %c0 = arith.constant 0 : index
    %c0_0 = arith.constant 0 : index
    %0 = vector.load %arg1[%c0, %c0_0] : memref<16x32xf32, #tpu.memory_space<vmem>>, vector<16x32xf32>
    %c0_1 = arith.constant 0 : index
    %c0_2 = arith.constant 0 : index
    %1 = vector.load %arg2[%c0_1, %c0_2] : memref<1x32xf32, #tpu.memory_space<vmem>>, vector<1x32xf32>
    %c0_3 = arith.constant 0 : index
    %c0_4 = arith.constant 0 : index
    %2 = vector.load %arg3[%c0_3, %c0_4] : memref<1x32xf32, #tpu.memory_space<vmem>>, vector<1x32xf32>
    %cst = arith.constant dense<0.000000e+00> : vector<16xf32>
    %3 = vector.multi_reduction <add>, %0, %cst [1] : vector<16x32xf32> to vector<16xf32>
    %4 = vector.shape_cast %3 : vector<16xf32> to vector<16x1xf32>
    %5 = arith.mulf %0, %0 : vector<16x32xf32>
    %cst_5 = arith.constant dense<0.000000e+00> : vector<16xf32>
    %6 = vector.multi_reduction <add>, %5, %cst_5 [1] : vector<16x32xf32> to vector<16xf32>
    %7 = vector.shape_cast %6 : vector<16xf32> to vector<16x1xf32>
    %cst_6 = arith.constant 3.125000e-02 : f32
    %8 = vector.broadcast %cst_6 : f32 to vector<16x1xf32>
    %9 = arith.mulf %4, %8 : vector<16x1xf32>
    %cst_7 = arith.constant 3.125000e-02 : f32
    %10 = vector.broadcast %cst_7 : f32 to vector<16x1xf32>
    %11 = arith.mulf %7, %10 : vector<16x1xf32>
    %12 = arith.mulf %9, %9 : vector<16x1xf32>
    %13 = arith.subf %11, %12 : vector<16x1xf32>
    %cst_8 = arith.constant 9.99999974E-6 : f32
    %14 = vector.broadcast %cst_8 : f32 to vector<16x1xf32>
    %15 = arith.addf %13, %14 : vector<16x1xf32>
    %16 = math.rsqrt %15 : vector<16x1xf32>
    %17 = vector.broadcast %9 : vector<16x1xf32> to vector<16x32xf32>
    %18 = arith.subf %0, %17 : vector<16x32xf32>
    %19 = vector.broadcast %16 : vector<16x1xf32> to vector<16x32xf32>
    %20 = arith.mulf %18, %19 : vector<16x32xf32>
    %21 = vector.broadcast %1 : vector<1x32xf32> to vector<16x32xf32>
    %22 = arith.mulf %20, %21 : vector<16x32xf32>
    %23 = vector.broadcast %2 : vector<1x32xf32> to vector<16x32xf32>
    %24 = arith.addf %22, %23 : vector<16x32xf32>
    %c0_9 = arith.constant 0 : index
    %c0_10 = arith.constant 0 : index
    %25 = vector.load %arg4[%c0_9, %c0_10] : memref<16x32xf32, #tpu.memory_space<vmem>>, vector<16x32xf32>
    tpu.vector_store %arg4[%c0_9, %c0_10], %24 {strides = array<i32>} : memref<16x32xf32, #tpu.memory_space<vmem>>, vector<16x32xf32>,
    return
  }
  func.func @transform_0(%arg0: i32) -> (i32, i32) {
    %c0_i32 = arith.constant 0 : i32
    %c0_i32_0 = arith.constant 0 : i32
    %c0_i32_1 = arith.constant 0 : i32
    return %c0_i32, %c0_i32_0 : i32, i32
  }
  func.func @transform_1(%arg0: i32) -> (i32, i32) {
    %c0_i32 = arith.constant 0 : i32
    %c0_i32_0 = arith.constant 0 : i32
    %c0_i32_1 = arith.constant 0 : i32
    return %c0_i32, %c0_i32_0 : i32, i32
  }
  func.func @transform_2(%arg0: i32) -> (i32, i32) {
    %c0_i32 = arith.constant 0 : i32
    %c0_i32_0 = arith.constant 0 : i32
    %c0_i32_1 = arith.constant 0 : i32
    return %c0_i32, %c0_i32_0 : i32, i32
  }
  func.func @transform_3(%arg0: i32) -> (i32, i32) {
    %c0_i32 = arith.constant 0 : i32
    %c0_i32_0 = arith.constant 0 : i32
    %c0_i32_1 = arith.constant 0 : i32
    return %c0_i32, %c0_i32_0 : i32, i32
  }
}

</mosaic_0001>

<llo_original>
// kernel: tpu_custom_call.1
$region0: #{tpu_custom_call.1}
  #allocation0 [shape = 'u32[]', space=smem, size = 0x4, offset = 0x4, fixed_abs, tag = 'smem constant byte address 0x4 - core index']
  #allocation1 [shape = 'u32[144,128]{1,0:T(1,128)}', space=vmem, size = 0x12000, scoped, tag = 'internal scratch']
  %s0 = inlined_call_operand.hbm [shape: f32[16,32], index: 0, kind: input, shape index: {}]
  %s1 = inlined_call_operand.vmem [shape: f32[1,32], index: 1, kind: input, shape index: {}]
  %s2 = inlined_call_operand.vmem [shape: f32[1,32], index: 2, kind: input, shape index: {}]
  %s3 = inlined_call_operand.hbm [shape: f32[16,32], index: 3, kind: output, shape index: {}]
  %s4 = sld [smem:[#allocation0]]
  $region26: #{tpu_custom_call.1} parent=0
    _
  %s6 = ssub.s32 1, %s4
  %s7 = scalar_select 0, %s6, %s4
  $region1: #{tpu_custom_call.1} parent=0
    #allocation2 [shape = 'u8[8192]{0}', space=vmem, size = 0x2000, scoped, tag = 'input window, operand 0, single buffered']
    #allocation3 [shape = 's32[1]{0}', space=sflag, size = 0x4, scoped, tag = 'scoped memory for tpu_custom_call.1']
    #allocation4 [shape = 's32[1]{0}', space=sflag, size = 0x4, scoped, tag = 'scoped memory for tpu_custom_call.1']
    #allocation5 [shape = 'u8[8192]{0}', space=vmem, size = 0x2000, scoped, tag = 'output window, operand 0, single buffered']
    %8 = vsyncpa [#allocation3], 0
    %9 = vsyncpa [#allocation4], 0
    // Predicated region
    $region2: #{tpu_custom_call.1} parent=1 // pred_check
      _
    $region3: #{tpu_custom_call.1} parent=1 // pred_check_branch
      %11 = sbr.rel (0) target = $region5
    $region4: #{tpu_custom_call.1} parent=1 // pred_region
      %s13 = ssub.s32 256, 256
      %14 = vsyncadd [#allocation3], %s13
      %s15 = sshll.u32 [#allocation2], 4
      %s16 = int_to_ptr.vmem [resolvable:$true] %s15
      %21 = dma.hbm_to_vmem [thread:$0]  %s0, 256, %s16, [#allocation3], 128, 128, 8
    $region5: #{tpu_custom_call.1} parent=1 // pred_fallthru
      _
    // Predicated region
    $region6: #{tpu_custom_call.1} parent=1 // pred_check
      _
    $region7: #{tpu_custom_call.1} parent=1 // pred_check_branch
      %23 = sbr.rel (0) target = $region9
    $region8: #{tpu_custom_call.1} parent=1 // pred_region
      _
    $region9: #{tpu_custom_call.1} parent=1 // pred_fallthru
      _
    // Predicated region
    $region10: #{tpu_custom_call.1} parent=1 // pred_check
      _
    $region11: #{tpu_custom_call.1} parent=1 // pred_check_branch
      %25 = sbr.rel (0) target = $region13
    $region12: #{tpu_custom_call.1} parent=1 // pred_region
      _
    $region13: #{tpu_custom_call.1} parent=1 // pred_fallthru
      _
    // Predicated region
    $region14: #{tpu_custom_call.1} parent=1 // pred_check
      _
    $region15: #{tpu_custom_call.1} parent=1 // pred_check_branch
      %27 = sbr.rel (0) target = $region17
    $region16: #{tpu_custom_call.1} parent=1 // pred_region
      %28 = dma.done [#allocation3], 256
    $region17: #{tpu_custom_call.1} parent=1 // pred_fallthru
      _
    %v29 = vld [vmem:[#allocation2] sm:$0xff]
    %v30 = vld [vmem:[#allocation2 + $0x8] sm:$0xff]
    %v31 = vld [vmem:[%s1] sm:$0x1]
    %v32 = vld [vmem:[%s2] sm:$0x1]
    %vm33 = vcmask 261120
    %v34 = vsel %vm33, %v29, 0.0
    %35 = vadd.xlane.f32.xlu0 %v34
    %v36 = vpop.xlane.xlu0 %35
    %v37 = vsel %vm33, %v30, 0.0
    %38 = vadd.xlane.f32.xlu0 %v37
    %v39 = vpop.xlane.xlu0 %38
    %v40 = vmul.f32 %v29, %v29
    %v41 = vmul.f32 %v30, %v30
    %v42 = vsel %vm33, %v40, 0.0
    %43 = vadd.xlane.f32.xlu0 %v42
    %v44 = vpop.xlane.xlu0 %43
    %v45 = vsel %vm33, %v41, 0.0
    %46 = vadd.xlane.f32.xlu0 %v45
    %v47 = vpop.xlane.xlu0 %46
    %v48 = vmul.f32 %v36, 0.03125
    %v49 = vmul.f32 %v39, 0.03125
    %v50 = vmul.f32 %v44, 0.03125
    %v51 = vmul.f32 %v47, 0.03125
    %v52 = vmul.f32 %v48, %v48
    %v53 = vmul.f32 %v49, %v49
    %v54 = vsub.f32 %v50, %v52
    %v55 = vsub.f32 %v51, %v53
    %v56 = vadd.f32 %v54, 1e-05
    %v57 = vadd.f32 %v55, 1e-05
    %v58 = vrsqrt.pop %v56
    %v59 = vrsqrt.pop %v57
    %v60 = vsub.f32 %v29, %v48
    %v61 = vsub.f32 %v30, %v49
    %v62 = vmul.f32 %v60, %v58
    %v63 = vmul.f32 %v61, %v59
    %v65 = vlaneseq
    %v66 = vshrl.u32 %v65, 7
    %v67 = vsub.s32 0, %v66
    %v68 = vrot.slane %v31, %v67
    %v70 = vmul.f32 %v62, %v68
    %v71 = vmul.f32 %v63, %v68
    %v73 = vlaneseq
    %v74 = vshrl.u32 %v73, 7
    %v75 = vsub.s32 0, %v74
    %v76 = vrot.slane %v32, %v75
    %v78 = vadd.f32 %v70, %v76
    %v79 = vadd.f32 %v71, %v76
    %80 = vst.msk [vmem:[#allocation5] sm:$0xff] %vm33, %v78
    %81 = vst.msk [vmem:[#allocation5 + $0x8] sm:$0xff] %vm33, %v79
    // Predicated region
    $region18: #{tpu_custom_call.1} parent=1 // pred_check
      _
    $region19: #{tpu_custom_call.1} parent=1 // pred_check_branch
      %83 = sbr.rel (0) target = $region21
    $region20: #{tpu_custom_call.1} parent=1 // pred_region
      %s85 = ssub.s32 256, 256
      %86 = vsyncadd [#allocation4], %s85
      %s87 = sshll.u32 [#allocation5], 4
      %s88 = int_to_ptr.vmem [resolvable:$true] %s87
      %93 = dma.vmem_to_hbm [thread:$0]  %s88, 256, %s3, [#allocation4], 128, 128, 8
    $region21: #{tpu_custom_call.1} parent=1 // pred_fallthru
      _
    // Predicated region
    $region22: #{tpu_custom_call.1} parent=1 // pred_check
      _
    $region23: #{tpu_custom_call.1} parent=1 // pred_check_branch
      %95 = sbr.rel (0) target = $region25
    $region24: #{tpu_custom_call.1} parent=1 // pred_region
      %96 = dma.done [#allocation4], 256
    $region25: #{tpu_custom_call.1} parent=1 // pred_fallthru
      _
    %97 = vsyncpa [#allocation3], 1
    %98 = vsyncpa [#allocation4], 1

</llo_original>
